<compile_context>
chip_gen: v5e
topology: v5e:2x2
jax: 0.10.0
libtpu: 0.0.40
codegen_flags: <defaults>
</compile_context>

<pallas_src>
import jax
import jax.numpy as jnp
from jax.experimental import pallas as pl
from jax.experimental.pallas import tpu as pltpu


def _round_up(x: int, m: int) -> int:
    return ((x + m - 1) // m) * m


def _vmem_budget_bytes() -> int:
    """Generation-aware scoped-VMEM budget (leaves headroom for internal scratch)."""
    kind = ""
    try:
        kind = jax.devices()[0].device_kind.lower()
    except Exception:
        pass
    if "v7" in kind:
        return 52 * 1024 * 1024          # 64 MiB/TC part: leave ~12 MiB headroom
    if "v5" in kind or "v6" in kind:
        return 110 * 1024 * 1024         # 128 MiB parts: use most of it
    return 52 * 1024 * 1024              # unknown backend: conservative


def _mlp_kernel(x_ref, w1_ref, b1_ref, w2_ref, b2_ref, o_ref):
    # fc1: x [BM, D] (cast to MXU dtype on the VPU) @ w1t [D, Hp] -> [BM, Hp] (f32 acc).
    x = x_ref[...].astype(w1_ref.dtype)
    h = jnp.dot(x, w1_ref[...], preferred_element_type=jnp.float32)
    h = jnp.maximum(h + b1_ref[...], 0.0)                       # bias + ReLU in f32

    # fc2: h [BM, Hp] @ w2t [Hp, Cp] -> logits [BM, Cp] (f32 acc + f32 bias).
    logits = jnp.dot(h.astype(w2_ref.dtype), w2_ref[...],
                     preferred_element_type=jnp.float32) + b2_ref[...]

    # Numerically stable softmax over dim=1 (classes), exact normalization.
    # Padded classes carry a -1e30 f32 bias -> exp() == 0 there, never win the max.
    m = jnp.max(logits, axis=1, keepdims=True)
    e = jnp.exp(logits - m)
    denom = jnp.sum(e, axis=1, keepdims=True)
    o_ref[...] = (e / denom).astype(o_ref.dtype)


def prepare_mlp_params(w1, b1, w2, b2, *, use_bf16: bool = True):
    """One-time weight prep: pad lane dims to 128, pre-transpose, cast for the MXU.

    w1: [H, D], b1: [H], w2: [C, H], b2: [C]  (PyTorch nn.Linear layout).
    Returns (w1t [D, Hp], b1p [1, Hp], w2t [Hp, Cp], b2p [1, Cp], C).
    """
    H, D = w1.shape
    C = w2.shape[0]
    Hp = _round_up(H, 128)
    Cp = _round_up(C, 128)
    mxu_dtype = jnp.bfloat16 if use_bf16 else jnp.float32

    # Zero padding is exact: zero hidden columns give relu(0 + 0) = 0 and the
    # corresponding zero rows of w2t contribute nothing to the logits.
    w1t = jnp.zeros((D, Hp), mxu_dtype).at[:, :H].set(w1.T.astype(mxu_dtype))
    b1p = jnp.zeros((1, Hp), jnp.float32).at[0, :H].set(b1.astype(jnp.float32))
    w2t = jnp.zeros((Hp, Cp), mxu_dtype).at[:H, :C].set(w2.T.astype(mxu_dtype))
    # Padded classes get a huge negative bias (added in f32) -> softmax(.) == 0 there.
    b2p = jnp.full((1, Cp), -1e30, jnp.float32).at[0, :C].set(b2.astype(jnp.float32))
    return (w1t, b1p, w2t, b2p, C)


def mlp_forward(x, params, *, block_m: int | None = None):
    """x: [B, D] float32.  params: output of prepare_mlp_params()."""
    w1t, b1p, w2t, b2p, C = params
    B, D = x.shape
    assert w1t.shape[0] == D, "feature dim mismatch"
    Hp = w1t.shape[1]
    Cp = w2t.shape[1]

    budget = _vmem_budget_bytes()
    if block_m is None:
        block_m = 1024 if budget >= 96 * 1024 * 1024 else 512  # bigger tiles on 128 MiB parts

    # Batch tile: avoid padding waste and give the v7x megacore >= 2 grid steps
    # when the batch is large enough to split.
    if B <= block_m:
        BM = _round_up(pl.cdiv(B, 2), 8) if B >= 16 else B
    else:
        BM = block_m
    grid = (pl.cdiv(B, BM),)

    # VMEM fit check (weights single-buffered, x/out double-buffered, f32 intermediates).
    itemsize = jnp.dtype(w1t.dtype).itemsize
    resident_bytes = (D * Hp + Hp * Cp) * itemsize + (Hp + Cp) * 4
    stream_bytes = 2 * (BM * D * x.dtype.itemsize + BM * Cp * 4)
    scratch_bytes = 2 * BM * (Hp + Cp) * 4
    if resident_bytes + stream_bytes + scratch_bytes > budget:
        # TODO(synk): fall back to an Hp-tiled fc1 / K-reduction-grid fc2 when the
        # resident weights do not fit the per-generation VMEM budget.
        raise ValueError("MLP weights + tiles exceed the VMEM budget; reduce block_m.")

    cost = pl.CostEstimate(
        flops=2 * B * (D * Hp + Hp * Cp),
        transcendentals=B * Cp,
        bytes_accessed=(B * D * x.dtype.itemsize           # x (read once, f32)
                        + (D * Hp + Hp * Cp) * itemsize    # weights
                        + (Hp + Cp) * 4                    # biases
                        + B * Cp * 4),                     # output
    )

    out_padded = pl.pallas_call(
        _mlp_kernel,
        out_shape=jax.ShapeDtypeStruct((B, Cp), jnp.float32),
        grid_spec=pltpu.PrefetchScalarGridSpec(
            num_scalar_prefetch=0,
            grid=grid,
            in_specs=[
                # x streams per batch tile (double-buffered by default).
                pl.BlockSpec((BM, D), lambda i: (i, 0)),
                # Weights/biases: constant index_map -> VMEM-resident; single-buffered.
                pl.BlockSpec((D, Hp), lambda i: (0, 0), pipeline_mode=pl.Buffered(1)),
                pl.BlockSpec((1, Hp), lambda i: (0, 0), pipeline_mode=pl.Buffered(1)),
                pl.BlockSpec((Hp, Cp), lambda i: (0, 0), pipeline_mode=pl.Buffered(1)),
                pl.BlockSpec((1, Cp), lambda i: (0, 0), pipeline_mode=pl.Buffered(1)),
            ],
            out_specs=pl.BlockSpec((BM, Cp), lambda i: (i, 0)),
        ),
        compiler_params=pltpu.CompilerParams(
            dimension_semantics=("parallel",),      # batch axis: megacore-shardable
            vmem_limit_bytes=budget,
        ),
        cost_estimate=cost,
    )(x, w1t, b1p, w2t, b2p)

    return out_padded[:, :C]


if __name__ == "__main__":
    # Shapes implied by MLP(num_dim, num_classes): hidden = 2 * num_dim.
    batch = 8
    num_dim = 32
    hidden = num_dim * 2
    num_classes = 16

    key = jax.random.PRNGKey(0)
    kx, kw1, kb1, kw2, kb2 = jax.random.split(key, 5)

    x = jax.random.normal(kx, (batch, num_dim), dtype=jnp.float32)

    # Deterministic "PyTorch-style" uniform(-1/sqrt(fan_in), 1/sqrt(fan_in)) init.
    bound1 = 1.0 / (num_dim ** 0.5)
    w1 = jax.random.uniform(kw1, (hidden, num_dim), jnp.float32, -bound1, bound1)
    b1 = jax.random.uniform(kb1, (hidden,), jnp.float32, -bound1, bound1)
    bound2 = 1.0 / (hidden ** 0.5)
    w2 = jax.random.uniform(kw2, (num_classes, hidden), jnp.float32, -bound2, bound2)
    b2 = jax.random.uniform(kb2, (num_classes,), jnp.float32, -bound2, bound2)

    # Weight prep happens ONCE here (not inside every forward call).
    params_bf16 = prepare_mlp_params(w1, b1, w2, b2, use_bf16=True)
    params_f32 = prepare_mlp_params(w1, b1, w2, b2, use_bf16=False)

    out = jax.block_until_ready(mlp_forward(x, params_bf16))

    # Reference in plain JAX (f32 math).
    h_ref = jnp.maximum(x @ w1.T + b1, 0.0)
    logits_ref = h_ref @ w2.T + b2
    ref = jax.nn.softmax(logits_ref, axis=1)

    assert out.shape == (batch, num_classes)
    # Exact normalization -> rows sum to 1 at f32 precision even on the bf16 path.
    assert jnp.allclose(jnp.sum(out, axis=1), 1.0, atol=1e-5)
    # bf16 MXU operands with f32 accumulation -> loosened elementwise tolerance.
    assert jnp.allclose(out, ref, atol=2e-2, rtol=2e-2)

    # Exact-precision path (f32 MXU operands) must match tightly.
    out_f32 = jax.block_until_ready(mlp_forward(x, params_f32))
    assert jnp.allclose(out_f32, ref, atol=1e-4, rtol=1e-4)
    assert jnp.allclose(jnp.sum(out_f32, axis=1), 1.0, atol=1e-5)

    print("KERNEL_OK")
</pallas_src>

<mosaic_0001>
module attributes {stable_mosaic.version = 11 : i64} {
  func.func @_mlp_kernel(%arg0: i32, %arg1: memref<8x32xf32, #tpu.memory_space<vmem>>, %arg2: memref<32x128xbf16, #tpu.memory_space<vmem>>, %arg3: memref<1x128xf32, #tpu.memory_space<vmem>>, %arg4: memref<128x128xbf16, #tpu.memory_space<vmem>>, %arg5: memref<1x128xf32, #tpu.memory_space<vmem>>, %arg6: memref<8x128xf32, #tpu.memory_space<vmem>>) attributes {dimension_semantics = [#tpu.dimension_semantics<parallel>], iteration_bounds = array<i64: 1>, scalar_prefetch = 0 : i64, scratch_operands = 0 : i64, tpu.core_type = #tpu.core_type<tc>, window_params = [{transform_indices = @transform_0, window_bounds = array<i64: 8, 32>}, {pipeline_mode = #tpu.pipeline_mode<synchronous>, transform_indices = @transform_1, window_bounds = array<i64: 32, 128>}, {pipeline_mode = #tpu.pipeline_mode<synchronous>, transform_indices = @transform_2, window_bounds = array<i64: 1, 128>}, {pipeline_mode = #tpu.pipeline_mode<synchronous>, transform_indices = @transform_3, window_bounds = array<i64: 128, 128>}, {pipeline_mode = #tpu.pipeline_mode<synchronous>, transform_indices = @transform_4, window_bounds = array<i64: 1, 128>}, {transform_indices = @transform_5, window_bounds = array<i64: 8, 128>}]} {
    %c0 = arith.constant 0 : index
    %c0_0 = arith.constant 0 : index
    %0 = vector.load %arg1[%c0, %c0_0] : memref<8x32xf32, #tpu.memory_space<vmem>>, vector<8x32xf32>
    %1 = arith.truncf %0 : vector<8x32xf32> to vector<8x32xbf16>
    %c0_1 = arith.constant 0 : index
    %c0_2 = arith.constant 0 : index
    %2 = vector.load %arg2[%c0_1, %c0_2] : memref<32x128xbf16, #tpu.memory_space<vmem>>, vector<32x128xbf16>
    %cst = arith.constant dense<0.000000e+00> : vector<8x128xf32>
    %3 = tpu.matmul %1, %2, %cst {dimension_numbers = #tpu.dot_dimension_numbers<[1], [0], [0], [1], [0, 0, 1, 1], [], []>} : vector<8x32xbf16>, vector<32x128xbf16>, vector<8x128xf32> -> vector<8x128xf32>
    %c0_3 = arith.constant 0 : index
    %c0_4 = arith.constant 0 : index
    %4 = vector.load %arg3[%c0_3, %c0_4] : memref<1x128xf32, #tpu.memory_space<vmem>>, vector<1x128xf32>
    %5 = vector.broadcast %4 : vector<1x128xf32> to vector<8x128xf32>
    %6 = arith.addf %3, %5 : vector<8x128xf32>
    %cst_5 = arith.constant 0.000000e+00 : f32
    %7 = vector.broadcast %cst_5 : f32 to vector<8x128xf32>
    %8 = arith.maximumf %6, %7 : vector<8x128xf32>
    %9 = arith.truncf %8 : vector<8x128xf32> to vector<8x128xbf16>
    %c0_6 = arith.constant 0 : index
    %c0_7 = arith.constant 0 : index
    %10 = vector.load %arg4[%c0_6, %c0_7] : memref<128x128xbf16, #tpu.memory_space<vmem>>, vector<128x128xbf16>
    %cst_8 = arith.constant dense<0.000000e+00> : vector<8x128xf32>
    %11 = tpu.matmul %9, %10, %cst_8 {dimension_numbers = #tpu.dot_dimension_numbers<[1], [0], [0], [1], [0, 0, 1, 1], [], []>} : vector<8x128xbf16>, vector<128x128xbf16>, vector<8x128xf32> -> vector<8x128xf32>
    %c0_9 = arith.constant 0 : index
    %c0_10 = arith.constant 0 : index
    %12 = vector.load %arg5[%c0_9, %c0_10] : memref<1x128xf32, #tpu.memory_space<vmem>>, vector<1x128xf32>
    %13 = vector.broadcast %12 : vector<1x128xf32> to vector<8x128xf32>
    %14 = arith.addf %11, %13 : vector<8x128xf32>
    %cst_11 = arith.constant dense<0xFF800000> : vector<8xf32>
    %15 = vector.multi_reduction <maximumf>, %14, %cst_11 [1] : vector<8x128xf32> to vector<8xf32>
    %16 = vector.shape_cast %15 : vector<8xf32> to vector<8x1xf32>
    %17 = vector.broadcast %16 : vector<8x1xf32> to vector<8x128xf32>
    %18 = arith.subf %14, %17 : vector<8x128xf32>
    %19 = math.exp %18 : vector<8x128xf32>
    %cst_12 = arith.constant dense<0.000000e+00> : vector<8xf32>
    %20 = vector.multi_reduction <add>, %19, %cst_12 [1] : vector<8x128xf32> to vector<8xf32>
    %21 = vector.shape_cast %20 : vector<8xf32> to vector<8x1xf32>
    %22 = vector.broadcast %21 : vector<8x1xf32> to vector<8x128xf32>
    %23 = arith.divf %19, %22 : vector<8x128xf32>
    %c0_13 = arith.constant 0 : index
    %c0_14 = arith.constant 0 : index
    %24 = vector.load %arg6[%c0_13, %c0_14] : memref<8x128xf32, #tpu.memory_space<vmem>>, vector<8x128xf32>
    tpu.vector_store %arg6[%c0_13, %c0_14], %23 {strides = array<i32>} : memref<8x128xf32, #tpu.memory_space<vmem>>, vector<8x128xf32>,
    return
  }
  func.func @transform_0(%arg0: i32) -> (i32, i32) {
    %c0_i32 = arith.constant 0 : i32
    %c0_i32_0 = arith.constant 0 : i32
    return %arg0, %c0_i32 : i32, i32
  }
  func.func @transform_1(%arg0: i32) -> (i32, i32) {
    %c0_i32 = arith.constant 0 : i32
    %c0_i32_0 = arith.constant 0 : i32
    %c0_i32_1 = arith.constant 0 : i32
    return %c0_i32, %c0_i32_0 : i32, i32
  }
  func.func @transform_2(%arg0: i32) -> (i32, i32) {
    %c0_i32 = arith.constant 0 : i32
    %c0_i32_0 = arith.constant 0 : i32
    %c0_i32_1 = arith.constant 0 : i32
    return %c0_i32, %c0_i32_0 : i32, i32
  }
  func.func @transform_3(%arg0: i32) -> (i32, i32) {
    %c0_i32 = arith.constant 0 : i32
    %c0_i32_0 = arith.constant 0 : i32
    %c0_i32_1 = arith.constant 0 : i32
    return %c0_i32, %c0_i32_0 : i32, i32
  }
  func.func @transform_4(%arg0: i32) -> (i32, i32) {
    %c0_i32 = arith.constant 0 : i32
    %c0_i32_0 = arith.constant 0 : i32
    %c0_i32_1 = arith.constant 0 : i32
    return %c0_i32, %c0_i32_0 : i32, i32
  }
  func.func @transform_5(%arg0: i32) -> (i32, i32) {
    %c0_i32 = arith.constant 0 : i32
    %c0_i32_0 = arith.constant 0 : i32
    return %arg0, %c0_i32 : i32, i32
  }
}

</mosaic_0001>

<llo_original>
// kernel: tpu_custom_call.1
$region0: #{tpu_custom_call.1}
  #allocation0 [shape = 'u32[]', space=smem, size = 0x4, offset = 0x4, fixed_abs, tag = 'smem constant byte address 0x4 - core index']
  #allocation1 [shape = 'u32[72,128]{1,0:T(1,128)}', space=vmem, size = 0x9000, scoped, tag = 'internal scratch']
  %s0 = inlined_call_operand.hbm [shape: f32[8,32], index: 0, kind: input, shape index: {}]
  %s1 = inlined_call_operand.hbm [shape: bf16[32,128], index: 1, kind: input, shape index: {}]
  %s2 = inlined_call_operand.vmem [shape: f32[1,128], index: 2, kind: input, shape index: {}]
  %s3 = inlined_call_operand.hbm [shape: bf16[128,128], index: 3, kind: input, shape index: {}]
  %s4 = inlined_call_operand.vmem [shape: f32[1,128], index: 4, kind: input, shape index: {}]
  %s5 = inlined_call_operand.hbm [shape: f32[8,128], index: 5, kind: output, shape index: {}]
  %s6 = sld [smem:[#allocation0]]
  $region42: #{tpu_custom_call.1} parent=0
    _
  %s8 = ssub.s32 1, %s6
  %s9 = scalar_select 0, %s8, %s6
  $region1: #{tpu_custom_call.1} parent=0
    #allocation2 [shape = 'u8[4096]{0}', space=vmem, size = 0x1000, scoped, tag = 'input window, operand 0, single buffered']
    #allocation3 [shape = 's32[1]{0}', space=sflag, size = 0x4, scoped, tag = 'scoped memory for tpu_custom_call.1']
    #allocation4 [shape = 's32[1]{0}', space=sflag, size = 0x4, scoped, tag = 'scoped memory for tpu_custom_call.1']
    #allocation5 [shape = 'u8[8192]{0}', space=vmem, size = 0x2000, scoped, tag = 'input window, operand 1, single buffered']
    #allocation6 [shape = 's32[1]{0}', space=sflag, size = 0x4, scoped, tag = 'scoped memory for tpu_custom_call.1']
    #allocation7 [shape = 'u8[32768]{0}', space=vmem, size = 0x8000, scoped, tag = 'input window, operand 3, single buffered']
    #allocation8 [shape = 'u8[4096]{0}', space=vmem, size = 0x1000, scoped, tag = 'output window, operand 0, single buffered']
    %10 = vsyncpa [#allocation3], 0
    %11 = vsyncpa [#allocation6], 0
    %12 = vsyncpa [#allocation4], 0
    // Predicated region
    $region2: #{tpu_custom_call.1} parent=1 // pred_check
      _
    $region3: #{tpu_custom_call.1} parent=1 // pred_check_branch
      %14 = sbr.rel (0) target = $region5
    $region4: #{tpu_custom_call.1} parent=1 // pred_region
      %16 = vsyncadd [#allocation3], 0
      %s18 = sshll.u32 %s0, 4
      %s19 = int_to_ptr.hbm [resolvable:$true] %s18
      %s20 = sshll.u32 [#allocation2], 4
      %s21 = int_to_ptr.vmem [resolvable:$true] %s20
      %23 = dma.hbm_to_vmem [thread:$0]  %s19, 128, %s21, [#allocation3]
    $region5: #{tpu_custom_call.1} parent=1 // pred_fallthru
      _
    // Predicated region
    $region6: #{tpu_custom_call.1} parent=1 // pred_check
      _
    $region7: #{tpu_custom_call.1} parent=1 // pred_check_branch
      %25 = sbr.rel (0) target = $region9
    $region8: #{tpu_custom_call.1} parent=1 // pred_region
      %27 = vsyncadd [#allocation6], 0
      %s28 = sshll.u32 %s1, 4
      %s29 = int_to_ptr.hbm [resolvable:$true] %s28
      %s30 = sshll.u32 [#allocation5], 4
      %s31 = int_to_ptr.vmem [resolvable:$true] %s30
      %36 = dma.hbm_to_vmem [thread:$0]  %s29, 256, %s31, [#allocation6], 64, 64, 4
    $region9: #{tpu_custom_call.1} parent=1 // pred_fallthru
      _
    // Predicated region
    $region10: #{tpu_custom_call.1} parent=1 // pred_check
      _
    $region11: #{tpu_custom_call.1} parent=1 // pred_check_branch
      %38 = sbr.rel (0) target = $region13
    $region12: #{tpu_custom_call.1} parent=1 // pred_region
      _
    $region13: #{tpu_custom_call.1} parent=1 // pred_fallthru
      _
    // Predicated region
    $region14: #{tpu_custom_call.1} parent=1 // pred_check
      _
    $region15: #{tpu_custom_call.1} parent=1 // pred_check_branch
      %40 = sbr.rel (0) target = $region17
    $region16: #{tpu_custom_call.1} parent=1 // pred_region
      %42 = vsyncadd [#allocation6], 0
      %s43 = sshll.u32 %s3, 4
      %s44 = int_to_ptr.hbm [resolvable:$true] %s43
      %s45 = sshll.u32 [#allocation7], 4
      %s46 = int_to_ptr.vmem [resolvable:$true] %s45
      %51 = dma.hbm_to_vmem [thread:$0]  %s44, 1024, %s46, [#allocation6], 64, 64, 4
    $region17: #{tpu_custom_call.1} parent=1 // pred_fallthru
      _
    // Predicated region
    $region18: #{tpu_custom_call.1} parent=1 // pred_check
      _
    $region19: #{tpu_custom_call.1} parent=1 // pred_check_branch
      %53 = sbr.rel (0) target = $region21
    $region20: #{tpu_custom_call.1} parent=1 // pred_region
      _
    $region21: #{tpu_custom_call.1} parent=1 // pred_fallthru
      _
    // Predicated region
    $region22: #{tpu_custom_call.1} parent=1 // pred_check
      _
    $region23: #{tpu_custom_call.1} parent=1 // pred_check_branch
      %55 = sbr.rel (0) target = $region25
    $region24: #{tpu_custom_call.1} parent=1 // pred_region
      %57 = dma.done [#allocation3], 128
    $region25: #{tpu_custom_call.1} parent=1 // pred_fallthru
      _
    // Predicated region
    $region26: #{tpu_custom_call.1} parent=1 // pred_check
      _
    $region27: #{tpu_custom_call.1} parent=1 // pred_check_branch
      %59 = sbr.rel (0) target = $region29
    $region28: #{tpu_custom_call.1} parent=1 // pred_region
      %61 = dma.done [#allocation6], 256
    $region29: #{tpu_custom_call.1} parent=1 // pred_fallthru
      _
    // Predicated region
    $region30: #{tpu_custom_call.1} parent=1 // pred_check
      _
    $region31: #{tpu_custom_call.1} parent=1 // pred_check_branch
      %63 = sbr.rel (0) target = $region33
    $region32: #{tpu_custom_call.1} parent=1 // pred_region
      %65 = dma.done [#allocation6], 1024
    $region33: #{tpu_custom_call.1} parent=1 // pred_fallthru
      _
    %v67 = vld [vmem:[#allocation2] sm:$0xff]
    %v68 = vpack.c.bf16 %v67, %v67
    %v69 = vld [vmem:[#allocation5] sm:$0xf]
    %v70 = vld [vmem:[#allocation5 + $0x4] sm:$0xf]
    %v71 = vld [vmem:[#allocation5 + $0x8] sm:$0xf]
    %v72 = vld [vmem:[#allocation5 + $0xc] sm:$0xf]
    %v73 = vld [vmem:[%s2] sm:$0x1]
    %v75 = vperm.slane %v73, 0
    %v81 = vunpack.c.l.b16 %v69
    %v82 = vunpack.c.l.b16 %v70
    %v83 = vunpack.c.l.b16 %v71
    %v84 = vunpack.c.l.b16 %v72
    %v85 = vpack.c.b16 %v82, %v81
    %v86 = vpack.c.b16 %v84, %v83
    %vm89 = vcmask 261120
    %v91 = vsel %vm89, %v68, 0
    %93 = vmatpush.bf16.msra.mxu0 0
    %94 = vmatpush.bf16.msra.mxu0 0
    %95 = vmatpush.bf16.msra.mxu0 0
    %96 = vmatpush.bf16.msra.mxu0 0
    %97 = vmatpush.bf16.msra.mxu0 0
    %98 = vmatpush.bf16.msra.mxu0 0
    %99 = vmatpush.bf16.msra.mxu0 %v86
    %100 = vmatpush.bf16.msra.mxu0 %v85
    %101 = vmatmul.bf16.gmra.mxu0 %v91
    %v102 = vpop.f32.mrf.mxu0
    %v103 = vadd.f32 %v75, %v102
    %v104 = vpop.f32.mrf.mxu0
    %105 = vdwg.mxu0
    %v106 = vmax.f32 %v103, 0.0
    %v107 = vpack.c.bf16 %v106, %v106
    %v108 = vld [vmem:[#allocation7] sm:$0xf]
    %v109 = vld [vmem:[#allocation7 + $0x4] sm:$0xf]
    %v110 = vld [vmem:[#allocation7 + $0x8] sm:$0xf]
    %v111 = vld [vmem:[#allocation7 + $0xc] sm:$0xf]
    %v112 = vld [vmem:[#allocation7 + $0x10] sm:$0xf]
    %v113 = vld [vmem:[#allocation7 + $0x14] sm:$0xf]
    %v114 = vld [vmem:[#allocation7 + $0x18] sm:$0xf]
    %v115 = vld [vmem:[#allocation7 + $0x1c] sm:$0xf]
    %v116 = vld [vmem:[#allocation7 + $0x20] sm:$0xf]
    %v117 = vld [vmem:[#allocation7 + $0x24] sm:$0xf]
    %v118 = vld [vmem:[#allocation7 + $0x28] sm:$0xf]
    %v119 = vld [vmem:[#allocation7 + $0x2c] sm:$0xf]
    %v120 = vld [vmem:[#allocation7 + $0x30] sm:$0xf]
    %v121 = vld [vmem:[#allocation7 + $0x34] sm:$0xf]
    %v122 = vld [vmem:[#allocation7 + $0x38] sm:$0xf]
    %v123 = vld [vmem:[#allocation7 + $0x3c] sm:$0xf]
    %v124 = vld [vmem:[%s4] sm:$0x1]
    %v126 = vperm.slane %v124, 0
    %v144 = vunpack.c.l.b16 %v108
    %v145 = vunpack.c.l.b16 %v109
    %v146 = vunpack.c.l.b16 %v110
    %v147 = vunpack.c.l.b16 %v111
    %v148 = vunpack.c.l.b16 %v112
    %v149 = vunpack.c.l.b16 %v113
    %v150 = vunpack.c.l.b16 %v114
    %v151 = vunpack.c.l.b16 %v115
    %v152 = vunpack.c.l.b16 %v116
    %v153 = vunpack.c.l.b16 %v117
    %v154 = vunpack.c.l.b16 %v118
    %v155 = vunpack.c.l.b16 %v119
    %v156 = vunpack.c.l.b16 %v120
    %v157 = vunpack.c.l.b16 %v121
    %v158 = vunpack.c.l.b16 %v122
    %v159 = vunpack.c.l.b16 %v123
    %v160 = vpack.c.b16 %v145, %v144
    %v161 = vpack.c.b16 %v147, %v146
    %v162 = vpack.c.b16 %v149, %v148
    %v163 = vpack.c.b16 %v151, %v150
    %v164 = vpack.c.b16 %v153, %v152
    %v165 = vpack.c.b16 %v155, %v154
    %v166 = vpack.c.b16 %v157, %v156
    %v167 = vpack.c.b16 %v159, %v158
    %176 = vmatpush.bf16.msra.mxu0 %v167
    %177 = vmatpush.bf16.msra.mxu0 %v166
    %178 = vmatpush.bf16.msra.mxu0 %v165
    %179 = vmatpush.bf16.msra.mxu0 %v164
    %180 = vmatpush.bf16.msra.mxu0 %v163
    %181 = vmatpush.bf16.msra.mxu0 %v162
    %182 = vmatpush.bf16.msra.mxu0 %v161
    %183 = vmatpush.bf16.msra.mxu0 %v160
    %184 = vmatmul.bf16.gmra.mxu0 %v107
    %v185 = vpop.f32.mrf.mxu0
    %v186 = vadd.f32 %v126, %v185
    %v187 = vpop.f32.mrf.mxu0
    %188 = vdwg.mxu0
    %189 = vmax.xlane.f32.xlu0 %v186
    %v190 = vpop.xlane.xlu0 %189
    %v191 = vsub.f32 %v186, %v190
    %v192 = vmul.f32 %v191, 1.442695
    %v193 = vpow.pop %v192
    %194 = vadd.xlane.f32.xlu0 %v193
    %v195 = vpop.xlane.xlu0 %194
    %v196 = vrcp.pop %v195
    %v197 = vmul.f32 %v195, %v196
    %v198 = vsub.f32 1.0, %v197
    %v199 = vmul.f32 %v196, %v198
    %v200 = vadd.f32 %v196, %v199
    %vm201 = vweird.f32 %v195
    %vm202 = vweird.f32 %v196
    %vm203 = vmor %vm201, %vm202
    %v204 = vsel %vm203, %v196, %v200
    %v205 = vand.u32 2147483647, %v195
    %vm206 = vcmp.eq.f32.partialorder %v205, 8.507059e+37
    %v207 = vand.u32 %v195, 2147483648
    %v208 = vor.u32 1.1754944e-38, %v207
    %v209 = vsel %vm206, %v208, %v204
    %v210 = vmul.f32 %v193, %v209
    %211 = vst [vmem:[#allocation8] sm:$0xff] %v210
    // Predicated region
    $region34: #{tpu_custom_call.1} parent=1 // pred_check
      _
    $region35: #{tpu_custom_call.1} parent=1 // pred_check_branch
      %213 = sbr.rel (0) target = $region37
    $region36: #{tpu_custom_call.1} parent=1 // pred_region
      %215 = vsyncadd [#allocation4], 0
      %s217 = sshll.u32 [#allocation8], 4
      %s218 = int_to_ptr.vmem [resolvable:$true] %s217
      %s219 = sshll.u32 %s5, 4
      %s220 = int_to_ptr.hbm [resolvable:$true] %s219
      %222 = dma.vmem_to_hbm [thread:$0]  %s218, 128, %s220, [#allocation4]
    $region37: #{tpu_custom_call.1} parent=1 // pred_fallthru
      _
    // Predicated region
    $region38: #{tpu_custom_call.1} parent=1 // pred_check
      _
    $region39: #{tpu_custom_call.1} parent=1 // pred_check_branch
      %224 = sbr.rel (0) target = $region41
    $region40: #{tpu_custom_call.1} parent=1 // pred_region
      %226 = dma.done [#allocation4], 128
    $region41: #{tpu_custom_call.1} parent=1 // pred_fallthru
      _
    %227 = vsyncpa [#allocation3], 1
    %228 = vsyncpa [#allocation6], 1
    %229 = vsyncpa [#allocation4], 1

</llo_original>
